<compile_context>
chip_gen: v7x
topology: tpu7x:2x2x1
jax: 0.10.0
libtpu: 0.0.40
codegen_flags: <defaults>
</compile_context>

<pallas_src>
import functools

import jax
import jax.numpy as jnp
from jax import lax
from jax.experimental import pallas as pl
from jax.experimental.pallas import tpu as pltpu

FEATURE_DIM = 512          # fixed by the .view(-1, 512) in the reference forward
NUM_PROTOTYPES = 128       # lane-aligned prototype count
EPS = 1e-12                # F.normalize default eps


def _round_up(x, m):
    return ((x + m - 1) // m) * m


def _make_kernel(num_views, compute_dtype):
    """Kernel over refs: (x_0, ..., x_{V-1}, w, out)."""

    def kernel(*refs):
        x_refs = refs[:num_views]
        w_ref = refs[num_views]          # (D, P), compute_dtype, VMEM-resident
        o_ref = refs[num_views + 1]      # (TB, V, P), out dtype

        w = w_ref[...]
        for v in range(num_views):
            # Cast to the MXU compute dtype in VMEM (free on a mem-bound kernel).
            xv = x_refs[v][...].astype(compute_dtype)            # (TB, D)
            proto = jnp.dot(xv, w, preferred_element_type=jnp.float32)  # (TB, P) f32
            # Row-wise L2 normalize, F.normalize semantics: x / max(||x||_2, eps).
            # rsqrt(max(sq, eps^2)) == 1 / max(sqrt(sq), eps) for sq >= 0;
            # zero (padded) rows normalize to exactly 0, no NaN.
            sq = jnp.sum(proto * proto, axis=1, keepdims=True)
            inv = lax.rsqrt(jnp.maximum(sq, EPS * EPS))
            o_ref[:, v, :] = (proto * inv).astype(o_ref.dtype)

    return kernel


@functools.partial(jax.jit, static_argnames=("tile_rows", "compute_dtype", "out_dtype"))
def prototype_network_forward(x_list, weight, *, tile_rows=2048,
                              compute_dtype=jnp.bfloat16, out_dtype=jnp.float32):
    """x_list: list/tuple of (B, 512) arrays. weight: (P, D) PyTorch-layout Linear weight.

    compute_dtype: MXU input dtype (bf16 default for speed; use jnp.float32 for
    bit-closer parity with the f32 PyTorch reference).
    """
    x_list = list(x_list)
    num_views = len(x_list)
    b, d = x_list[0].shape
    p = weight.shape[0]

    # One-time (K, N) = (D, P) weight layout for the MXU; tiny (D*P) copy.
    w = weight.T.astype(compute_dtype)

    in_dtype = x_list[0].dtype
    # Sublane multiple for the input blocks (8 rows for 4-byte, 16 for 2-byte dtypes).
    sub = 8 if jnp.dtype(in_dtype).itemsize >= 4 else 16

    # Pad each view only up to the sublane multiple (no stacked-array pad).
    b_pad = _round_up(b, sub)
    pad = b_pad - b
    if pad:
        x_list = [jnp.pad(xv, ((0, pad), (0, 0))) for xv in x_list]

    # Row tile: as large as VMEM comfortably allows, multiple of `sub`, <= b_pad.
    tb = min(_round_up(tile_rows, sub), b_pad)

    def _footprint(t):  # double-buffered VMEM footprint estimate
        in_bytes = 2 * num_views * t * d * jnp.dtype(in_dtype).itemsize
        out_bytes = 2 * t * num_views * p * jnp.dtype(out_dtype).itemsize
        w_bytes = 2 * d * p * jnp.dtype(compute_dtype).itemsize
        return in_bytes + out_bytes + w_bytes

    while tb > sub and _footprint(tb) > 24 * 1024 * 1024:
        tb = _round_up(tb // 2, sub)

    # v7x megacore: give the parallel axis >= 2 steps when possible so the
    # second TensorCore is not idle for mid-size batches.
    if pl.cdiv(b_pad, tb) < 2 and tb >= 2 * sub:
        tb = _round_up(tb // 2, sub)

    grid = (pl.cdiv(b_pad, tb),)

    in_specs = [pl.BlockSpec((tb, d), lambda i: (i, 0)) for _ in range(num_views)]
    in_specs.append(pl.BlockSpec((d, p), lambda i: (0, 0)))      # weight, VMEM-resident
    out_spec = pl.BlockSpec((tb, num_views, p), lambda i: (i, 0, 0))

    out = pl.pallas_call(
        _make_kernel(num_views, compute_dtype),
        out_shape=jax.ShapeDtypeStruct((b_pad, num_views, p), out_dtype),
        grid_spec=pltpu.PrefetchScalarGridSpec(
            num_scalar_prefetch=0,
            grid=grid,
            in_specs=in_specs,
            out_specs=out_spec,
        ),
        compiler_params=pltpu.CompilerParams(
            dimension_semantics=("parallel",),       # independent rows
            vmem_limit_bytes=32 * 1024 * 1024,
        ),
    )(*x_list, w)

    if pad:
        out = out[:b]
    # Row-major reshape keeps the torch.stack(dim=1).view(-1, 512) row order:
    # out[b_idx * num_views + v] = normalize(x_list[v][b_idx] @ W.T)
    return out.reshape(b * num_views, p)


def _reference(x_list, weight):
    x = jnp.stack(list(x_list), axis=1).reshape(-1, FEATURE_DIM).astype(jnp.float32)
    proto = x @ weight.T.astype(jnp.float32)
    norm = jnp.sqrt(jnp.sum(proto * proto, axis=1, keepdims=True))
    return proto / jnp.maximum(norm, EPS)


if __name__ == "__main__":
    key = jax.random.PRNGKey(0)
    k_x0, k_x1, k_w = jax.random.split(key, 3)

    batch = 4
    num_views = 2  # the list `x` in forward has multiple views stacked on dim=1

    # deterministic synthetic inputs
    x0 = jax.random.normal(k_x0, (batch, FEATURE_DIM), dtype=jnp.float32)
    x1 = jax.random.normal(k_x1, (batch, FEATURE_DIM), dtype=jnp.float32)
    x_list = [x0, x1]

    # deterministic Linear(512, P, bias=False) weight, PyTorch default-ish uniform init
    bound = 1.0 / (FEATURE_DIM ** 0.5)
    weight = jax.random.uniform(
        k_w, (NUM_PROTOTYPES, FEATURE_DIM), dtype=jnp.float32,
        minval=-bound, maxval=bound)

    ref = _reference(x_list, weight)

    # Performance default: bf16 MXU inputs, f32 accumulation/epilogue.
    out_bf16 = prototype_network_forward(x_list, weight)
    jax.block_until_ready(out_bf16)
    assert out_bf16.shape == (batch * num_views, NUM_PROTOTYPES)
    assert jnp.allclose(out_bf16, ref, atol=2e-2, rtol=2e-2), "bf16 path mismatch vs reference"

    # Full-precision path: bit-close parity with the f32 PyTorch reference.
    out_f32 = prototype_network_forward(x_list, weight, compute_dtype=jnp.float32)
    jax.block_until_ready(out_f32)
    assert out_f32.shape == (batch * num_views, NUM_PROTOTYPES)
    assert jnp.allclose(out_f32, ref, atol=1e-5, rtol=1e-5), "f32 path mismatch vs reference"

    print("KERNEL_OK")
</pallas_src>

<mosaic_0001>
module attributes {stable_mosaic.version = 11 : i64} {
  func.func @kernel(%arg0: i32, %arg1: memref<8x512xf32, #tpu.memory_space<vmem>>, %arg2: memref<8x512xf32, #tpu.memory_space<vmem>>, %arg3: memref<512x128xbf16, #tpu.memory_space<vmem>>, %arg4: memref<8x2x128xf32, #tpu.memory_space<vmem>>) attributes {dimension_semantics = [#tpu.dimension_semantics<parallel>], iteration_bounds = array<i64: 1>, scalar_prefetch = 0 : i64, scratch_operands = 0 : i64, tpu.core_type = #tpu.core_type<tc>, window_params = [{transform_indices = @transform_0, window_bounds = array<i64: 8, 512>}, {transform_indices = @transform_1, window_bounds = array<i64: 8, 512>}, {pipeline_mode = #tpu.pipeline_mode<synchronous>, transform_indices = @transform_2, window_bounds = array<i64: 512, 128>}, {transform_indices = @transform_3, window_bounds = array<i64: 8, 2, 128>}]} {
    %c0 = arith.constant 0 : index
    %c0_0 = arith.constant 0 : index
    %0 = vector.load %arg3[%c0, %c0_0] : memref<512x128xbf16, #tpu.memory_space<vmem>>, vector<512x128xbf16>
    %c0_1 = arith.constant 0 : index
    %c0_2 = arith.constant 0 : index
    %1 = vector.load %arg1[%c0_1, %c0_2] : memref<8x512xf32, #tpu.memory_space<vmem>>, vector<8x512xf32>
    %2 = arith.truncf %1 : vector<8x512xf32> to vector<8x512xbf16>
    %cst = arith.constant dense<0.000000e+00> : vector<8x128xf32>
    %3 = tpu.matmul %2, %0, %cst {dimension_numbers = #tpu.dot_dimension_numbers<[1], [0], [0], [1], [0, 0, 1, 1], [], []>} : vector<8x512xbf16>, vector<512x128xbf16>, vector<8x128xf32> -> vector<8x128xf32>
    %4 = arith.mulf %3, %3 : vector<8x128xf32>
    %cst_3 = arith.constant dense<0.000000e+00> : vector<8xf32>
    %5 = vector.multi_reduction <add>, %4, %cst_3 [1] : vector<8x128xf32> to vector<8xf32>
    %6 = vector.shape_cast %5 : vector<8xf32> to vector<8x1xf32>
    %cst_4 = arith.constant 1.000000e-24 : f32
    %7 = vector.broadcast %cst_4 : f32 to vector<8x1xf32>
    %8 = arith.maximumf %6, %7 : vector<8x1xf32>
    %9 = math.rsqrt %8 : vector<8x1xf32>
    %10 = vector.broadcast %9 : vector<8x1xf32> to vector<8x128xf32>
    %11 = arith.mulf %3, %10 : vector<8x128xf32>
    %c0_5 = arith.constant 0 : index
    %c0_6 = arith.constant 0 : index
    %c0_7 = arith.constant 0 : index
    %12 = vector.load %arg4[%c0_5, %c0_6, %c0_7] : memref<8x2x128xf32, #tpu.memory_space<vmem>>, vector<8x1x128xf32>
    %13 = vector.shape_cast %12 : vector<8x1x128xf32> to vector<8x128xf32>
    %14 = vector.shape_cast %11 : vector<8x128xf32> to vector<8x1x128xf32>
    tpu.vector_store %arg4[%c0_5, %c0_6, %c0_7], %14 {strides = array<i32>} : memref<8x2x128xf32, #tpu.memory_space<vmem>>, vector<8x1x128xf32>,
    %c0_8 = arith.constant 0 : index
    %c0_9 = arith.constant 0 : index
    %15 = vector.load %arg2[%c0_8, %c0_9] : memref<8x512xf32, #tpu.memory_space<vmem>>, vector<8x512xf32>
    %16 = arith.truncf %15 : vector<8x512xf32> to vector<8x512xbf16>
    %cst_10 = arith.constant dense<0.000000e+00> : vector<8x128xf32>
    %17 = tpu.matmul %16, %0, %cst_10 {dimension_numbers = #tpu.dot_dimension_numbers<[1], [0], [0], [1], [0, 0, 1, 1], [], []>} : vector<8x512xbf16>, vector<512x128xbf16>, vector<8x128xf32> -> vector<8x128xf32>
    %18 = arith.mulf %17, %17 : vector<8x128xf32>
    %cst_11 = arith.constant dense<0.000000e+00> : vector<8xf32>
    %19 = vector.multi_reduction <add>, %18, %cst_11 [1] : vector<8x128xf32> to vector<8xf32>
    %20 = vector.shape_cast %19 : vector<8xf32> to vector<8x1xf32>
    %cst_12 = arith.constant 1.000000e-24 : f32
    %21 = vector.broadcast %cst_12 : f32 to vector<8x1xf32>
    %22 = arith.maximumf %20, %21 : vector<8x1xf32>
    %23 = math.rsqrt %22 : vector<8x1xf32>
    %24 = vector.broadcast %23 : vector<8x1xf32> to vector<8x128xf32>
    %25 = arith.mulf %17, %24 : vector<8x128xf32>
    %c0_13 = arith.constant 0 : index
    %c1 = arith.constant 1 : index
    %c0_14 = arith.constant 0 : index
    %26 = vector.load %arg4[%c0_13, %c1, %c0_14] : memref<8x2x128xf32, #tpu.memory_space<vmem>>, vector<8x1x128xf32>
    %27 = vector.shape_cast %26 : vector<8x1x128xf32> to vector<8x128xf32>
    %28 = vector.shape_cast %25 : vector<8x128xf32> to vector<8x1x128xf32>
    tpu.vector_store %arg4[%c0_13, %c1, %c0_14], %28 {strides = array<i32>} : memref<8x2x128xf32, #tpu.memory_space<vmem>>, vector<8x1x128xf32>,
    return
  }
  func.func @transform_0(%arg0: i32) -> (i32, i32) {
    %c0_i32 = arith.constant 0 : i32
    %c0_i32_0 = arith.constant 0 : i32
    return %arg0, %c0_i32 : i32, i32
  }
  func.func @transform_1(%arg0: i32) -> (i32, i32) {
    %c0_i32 = arith.constant 0 : i32
    %c0_i32_0 = arith.constant 0 : i32
    return %arg0, %c0_i32 : i32, i32
  }
  func.func @transform_2(%arg0: i32) -> (i32, i32) {
    %c0_i32 = arith.constant 0 : i32
    %c0_i32_0 = arith.constant 0 : i32
    %c0_i32_1 = arith.constant 0 : i32
    return %c0_i32, %c0_i32_0 : i32, i32
  }
  func.func @transform_3(%arg0: i32) -> (i32, i32, i32) {
    %c0_i32 = arith.constant 0 : i32
    %c0_i32_0 = arith.constant 0 : i32
    %c0_i32_1 = arith.constant 0 : i32
    return %arg0, %c0_i32, %c0_i32_0 : i32, i32, i32
  }
}

</mosaic_0001>

<llo_original>
// kernel: prototype_network_forward.1
$region0: #{prototype_network_forward.1}
  #allocation0 [shape = 'u32[]', space=smem, size = 0x4, offset = 0x4, fixed_abs, tag = 'smem constant byte address 0x4 - core index']
  #allocation1 [shape = 'u32[144,128]{1,0:T(1,128)}', space=vmem, size = 0x12000, scoped, tag = 'internal scratch']
  %s0 = inlined_call_operand.vmem [shape: f32[8,512], index: 0, kind: input, shape index: {}]
  %s1 = inlined_call_operand.vmem [shape: f32[8,512], index: 1, kind: input, shape index: {}]
  %s2 = inlined_call_operand.vmem [shape: bf16[512,128], index: 2, kind: input, shape index: {}]
  %s3 = inlined_call_operand.vmem [shape: f32[8,2,128], index: 3, kind: output, shape index: {}]
  %s4 = sld [smem:[#allocation0]]
  $region22: #{prototype_network_forward.1} parent=0
    _
  %s6 = ssub.s32 1, %s4
  %s7 = scalar_select 0, %s6, %s4
  // Predicated region
  $region2: #{prototype_network_forward.1} parent=0 // pred_check
    _
  $region3: #{prototype_network_forward.1} parent=0 // pred_check_branch
    %9 = sbr.rel (0) target = $region5
  $region4: #{prototype_network_forward.1} parent=0 // pred_region
    _
  $region5: #{prototype_network_forward.1} parent=0 // pred_fallthru
    _
  // Predicated region
  $region6: #{prototype_network_forward.1} parent=0 // pred_check
    _
  $region7: #{prototype_network_forward.1} parent=0 // pred_check_branch
    %11 = sbr.rel (0) target = $region9
  $region8: #{prototype_network_forward.1} parent=0 // pred_region
    _
  $region9: #{prototype_network_forward.1} parent=0 // pred_fallthru
    _
  // Predicated region
  $region10: #{prototype_network_forward.1} parent=0 // pred_check
    _
  $region11: #{prototype_network_forward.1} parent=0 // pred_check_branch
    %13 = sbr.rel (0) target = $region13
  $region12: #{prototype_network_forward.1} parent=0 // pred_region
    _
  $region13: #{prototype_network_forward.1} parent=0 // pred_fallthru
    _
  %v15 = vld [vmem:[%s2] sm:$0xf]
  %v16 = vld [vmem:[%s2 + $0x4] sm:$0xf]
  %v17 = vld [vmem:[%s2 + $0x8] sm:$0xf]
  %v18 = vld [vmem:[%s2 + $0xc] sm:$0xf]
  %v19 = vld [vmem:[%s2 + $0x10] sm:$0xf]
  %v20 = vld [vmem:[%s2 + $0x14] sm:$0xf]
  %v21 = vld [vmem:[%s2 + $0x18] sm:$0xf]
  %v22 = vld [vmem:[%s2 + $0x1c] sm:$0xf]
  %v23 = vld [vmem:[%s2 + $0x20] sm:$0xf]
  %v24 = vld [vmem:[%s2 + $0x24] sm:$0xf]
  %v25 = vld [vmem:[%s2 + $0x28] sm:$0xf]
  %v26 = vld [vmem:[%s2 + $0x2c] sm:$0xf]
  %v27 = vld [vmem:[%s2 + $0x30] sm:$0xf]
  %v28 = vld [vmem:[%s2 + $0x34] sm:$0xf]
  %v29 = vld [vmem:[%s2 + $0x38] sm:$0xf]
  %v30 = vld [vmem:[%s2 + $0x3c] sm:$0xf]
  %v31 = vld [vmem:[%s2 + $0x40] sm:$0xf]
  %v32 = vld [vmem:[%s2 + $0x44] sm:$0xf]
  %v33 = vld [vmem:[%s2 + $0x48] sm:$0xf]
  %v34 = vld [vmem:[%s2 + $0x4c] sm:$0xf]
  %v35 = vld [vmem:[%s2 + $0x50] sm:$0xf]
  %v36 = vld [vmem:[%s2 + $0x54] sm:$0xf]
  %v37 = vld [vmem:[%s2 + $0x58] sm:$0xf]
  %v38 = vld [vmem:[%s2 + $0x5c] sm:$0xf]
  %v39 = vld [vmem:[%s2 + $0x60] sm:$0xf]
  %v40 = vld [vmem:[%s2 + $0x64] sm:$0xf]
  %v41 = vld [vmem:[%s2 + $0x68] sm:$0xf]
  %v42 = vld [vmem:[%s2 + $0x6c] sm:$0xf]
  %v43 = vld [vmem:[%s2 + $0x70] sm:$0xf]
  %v44 = vld [vmem:[%s2 + $0x74] sm:$0xf]
  %v45 = vld [vmem:[%s2 + $0x78] sm:$0xf]
  %v46 = vld [vmem:[%s2 + $0x7c] sm:$0xf]
  %v47 = vld [vmem:[%s2 + $0x80] sm:$0xf]
  %v48 = vld [vmem:[%s2 + $0x84] sm:$0xf]
  %v49 = vld [vmem:[%s2 + $0x88] sm:$0xf]
  %v50 = vld [vmem:[%s2 + $0x8c] sm:$0xf]
  %v51 = vld [vmem:[%s2 + $0x90] sm:$0xf]
  %v52 = vld [vmem:[%s2 + $0x94] sm:$0xf]
  %v53 = vld [vmem:[%s2 + $0x98] sm:$0xf]
  %v54 = vld [vmem:[%s2 + $0x9c] sm:$0xf]
  %v55 = vld [vmem:[%s2 + $0xa0] sm:$0xf]
  %v56 = vld [vmem:[%s2 + $0xa4] sm:$0xf]
  %v57 = vld [vmem:[%s2 + $0xa8] sm:$0xf]
  %v58 = vld [vmem:[%s2 + $0xac] sm:$0xf]
  %v59 = vld [vmem:[%s2 + $0xb0] sm:$0xf]
  %v60 = vld [vmem:[%s2 + $0xb4] sm:$0xf]
  %v61 = vld [vmem:[%s2 + $0xb8] sm:$0xf]
  %v62 = vld [vmem:[%s2 + $0xbc] sm:$0xf]
  %v63 = vld [vmem:[%s2 + $0xc0] sm:$0xf]
  %v64 = vld [vmem:[%s2 + $0xc4] sm:$0xf]
  %v65 = vld [vmem:[%s2 + $0xc8] sm:$0xf]
  %v66 = vld [vmem:[%s2 + $0xcc] sm:$0xf]
  %v67 = vld [vmem:[%s2 + $0xd0] sm:$0xf]
  %v68 = vld [vmem:[%s2 + $0xd4] sm:$0xf]
  %v69 = vld [vmem:[%s2 + $0xd8] sm:$0xf]
  %v70 = vld [vmem:[%s2 + $0xdc] sm:$0xf]
  %v71 = vld [vmem:[%s2 + $0xe0] sm:$0xf]
  %v72 = vld [vmem:[%s2 + $0xe4] sm:$0xf]
  %v73 = vld [vmem:[%s2 + $0xe8] sm:$0xf]
  %v74 = vld [vmem:[%s2 + $0xec] sm:$0xf]
  %v75 = vld [vmem:[%s2 + $0xf0] sm:$0xf]
  %v76 = vld [vmem:[%s2 + $0xf4] sm:$0xf]
  %v77 = vld [vmem:[%s2 + $0xf8] sm:$0xf]
  %v78 = vld [vmem:[%s2 + $0xfc] sm:$0xf]
  %v79 = vld [vmem:[%s0] sm:$0xff]
  %v80 = vld [vmem:[%s0 + $0x8] sm:$0xff]
  %v81 = vld [vmem:[%s0 + $0x10] sm:$0xff]
  %v82 = vld [vmem:[%s0 + $0x18] sm:$0xff]
  %v83 = vpack.c.bf16 %v79, %v79
  %v84 = vpack.c.bf16 %v80, %v80
  %v85 = vpack.c.bf16 %v81, %v81
  %v86 = vpack.c.bf16 %v82, %v82
  %v151 = vunpack.c.l.b16 %v15
  %v152 = vunpack.c.l.b16 %v16
  %v153 = vunpack.c.l.b16 %v17
  %v154 = vunpack.c.l.b16 %v18
  %v155 = vunpack.c.l.b16 %v19
  %v156 = vunpack.c.l.b16 %v20
  %v157 = vunpack.c.l.b16 %v21
  %v158 = vunpack.c.l.b16 %v22
  %v159 = vunpack.c.l.b16 %v23
  %v160 = vunpack.c.l.b16 %v24
  %v161 = vunpack.c.l.b16 %v25
  %v162 = vunpack.c.l.b16 %v26
  %v163 = vunpack.c.l.b16 %v27
  %v164 = vunpack.c.l.b16 %v28
  %v165 = vunpack.c.l.b16 %v29
  %v166 = vunpack.c.l.b16 %v30
  %v167 = vunpack.c.l.b16 %v31
  %v168 = vunpack.c.l.b16 %v32
  %v169 = vunpack.c.l.b16 %v33
  %v170 = vunpack.c.l.b16 %v34
  %v171 = vunpack.c.l.b16 %v35
  %v172 = vunpack.c.l.b16 %v36
  %v173 = vunpack.c.l.b16 %v37
  %v174 = vunpack.c.l.b16 %v38
  %v175 = vunpack.c.l.b16 %v39
  %v176 = vunpack.c.l.b16 %v40
  %v177 = vunpack.c.l.b16 %v41
  %v178 = vunpack.c.l.b16 %v42
  %v179 = vunpack.c.l.b16 %v43
  %v180 = vunpack.c.l.b16 %v44
  %v181 = vunpack.c.l.b16 %v45
  %v182 = vunpack.c.l.b16 %v46
  %v183 = vunpack.c.l.b16 %v47
  %v184 = vunpack.c.l.b16 %v48
  %v185 = vunpack.c.l.b16 %v49
  %v186 = vunpack.c.l.b16 %v50
  %v187 = vunpack.c.l.b16 %v51
  %v188 = vunpack.c.l.b16 %v52
  %v189 = vunpack.c.l.b16 %v53
  %v190 = vunpack.c.l.b16 %v54
  %v191 = vunpack.c.l.b16 %v55
  %v192 = vunpack.c.l.b16 %v56
  %v193 = vunpack.c.l.b16 %v57
  %v194 = vunpack.c.l.b16 %v58
  %v195 = vunpack.c.l.b16 %v59
  %v196 = vunpack.c.l.b16 %v60
  %v197 = vunpack.c.l.b16 %v61
  %v198 = vunpack.c.l.b16 %v62
  %v199 = vunpack.c.l.b16 %v63
  %v200 = vunpack.c.l.b16 %v64
  %v201 = vunpack.c.l.b16 %v65
  %v202 = vunpack.c.l.b16 %v66
  %v203 = vunpack.c.l.b16 %v67
  %v204 = vunpack.c.l.b16 %v68
  %v205 = vunpack.c.l.b16 %v69
  %v206 = vunpack.c.l.b16 %v70
  %v207 = vunpack.c.l.b16 %v71
  %v208 = vunpack.c.l.b16 %v72
  %v209 = vunpack.c.l.b16 %v73
  %v210 = vunpack.c.l.b16 %v74
  %v211 = vunpack.c.l.b16 %v75
  %v212 = vunpack.c.l.b16 %v76
  %v213 = vunpack.c.l.b16 %v77
  %v214 = vunpack.c.l.b16 %v78
  %v215 = vpack.c.b16 %v152, %v151
  %v216 = vpack.c.b16 %v154, %v153
  %v217 = vpack.c.b16 %v156, %v155
  %v218 = vpack.c.b16 %v158, %v157
  %v219 = vpack.c.b16 %v160, %v159
  %v220 = vpack.c.b16 %v162, %v161
  %v221 = vpack.c.b16 %v164, %v163
  %v222 = vpack.c.b16 %v166, %v165
  %v223 = vpack.c.b16 %v168, %v167
  %v224 = vpack.c.b16 %v170, %v169
  %v225 = vpack.c.b16 %v172, %v171
  %v226 = vpack.c.b16 %v174, %v173
  %v227 = vpack.c.b16 %v176, %v175
  %v228 = vpack.c.b16 %v178, %v177
  %v229 = vpack.c.b16 %v180, %v179
  %v230 = vpack.c.b16 %v182, %v181
  %v231 = vpack.c.b16 %v184, %v183
  %v232 = vpack.c.b16 %v186, %v185
  %v233 = vpack.c.b16 %v188, %v187
  %v234 = vpack.c.b16 %v190, %v189
  %v235 = vpack.c.b16 %v192, %v191
  %v236 = vpack.c.b16 %v194, %v193
  %v237 = vpack.c.b16 %v196, %v195
  %v238 = vpack.c.b16 %v198, %v197
  %v239 = vpack.c.b16 %v200, %v199
  %v240 = vpack.c.b16 %v202, %v201
  %v241 = vpack.c.b16 %v204, %v203
  %v242 = vpack.c.b16 %v206, %v205
  %v243 = vpack.c.b16 %v208, %v207
  %v244 = vpack.c.b16 %v210, %v209
  %v245 = vpack.c.b16 %v212, %v211
  %v246 = vpack.c.b16 %v214, %v213
  %279 = vmatprep.subr.bf16.mxu0 0
  %280 = vmatpush1.bf16.msra.mxu0 %v215
  %281 = vmatprep.subr.bf16.mxu0 0
  %282 = vmatpush1.bf16.msra.mxu0 %v216
  %283 = vmatprep.subr.bf16.mxu0 0
  %284 = vmatpush1.bf16.msra.mxu0 %v217
  %285 = vmatprep.subr.bf16.mxu0 0
  %286 = vmatpush1.bf16.msra.mxu0 %v218
  %287 = vmatprep.subr.bf16.mxu0 0
  %288 = vmatpush1.bf16.msra.mxu0 %v219
  %289 = vmatprep.subr.bf16.mxu0 0
  %290 = vmatpush1.bf16.msra.mxu0 %v220
  %291 = vmatprep.subr.bf16.mxu0 0
  %292 = vmatpush1.bf16.msra.mxu0 %v221
  %293 = vmatprep.subr.bf16.mxu0 0
  %294 = vmatpush1.bf16.msra.mxu0 %v222
  %295 = vmatprep.subr.bf16.mxu0 0
  %296 = vmatpush1.bf16.msra.mxu0 %v223
  %297 = vmatprep.subr.bf16.mxu0 0
  %298 = vmatpush1.bf16.msra.mxu0 %v224
  %299 = vmatprep.subr.bf16.mxu0 0
  %300 = vmatpush1.bf16.msra.mxu0 %v225
  %301 = vmatprep.subr.bf16.mxu0 0
  %302 = vmatpush1.bf16.msra.mxu0 %v226
  %303 = vmatprep.subr.bf16.mxu0 0
  %304 = vmatpush1.bf16.msra.mxu0 %v227
  %305 = vmatprep.subr.bf16.mxu0 0
  %306 = vmatpush1.bf16.msra.mxu0 %v228
  %307 = vmatprep.subr.bf16.mxu0 0
  %308 = vmatpush1.bf16.msra.mxu0 %v229
  %309 = vmatprep.subr.bf16.mxu0 0
  %310 = vmatpush1.bf16.msra.mxu0 %v230
  %311 = vmatprep.mubr.bf16.mxu0 %v84
  %312 = vmatmul.mubr.bf16.gmra.mrb[0].mxu0 %v83
  %v313 = vpop.f32.mrb[0].mxu0
  %v314 = vadd.f32 0.0, %v313
  %v315 = vpop.f32.mrb[0].mxu0
  %v316 = vpop.f32.mrb[0].mxu0
  %v317 = vpop.f32.mrb[0].mxu0
  %318 = vdwg.mxu0
  %319 = vmatprep.subr.bf16.mxu0 0
  %320 = vmatpush1.bf16.msra.mxu0 %v231
  %321 = vmatprep.subr.bf16.mxu0 0
  %322 = vmatpush1.bf16.msra.mxu0 %v232
  %323 = vmatprep.subr.bf16.mxu0 0
  %324 = vmatpush1.bf16.msra.mxu0 %v233
  %325 = vmatprep.subr.bf16.mxu0 0
  %326 = vmatpush1.bf16.msra.mxu0 %v234
  %327 = vmatprep.subr.bf16.mxu0 0
  %328 = vmatpush1.bf16.msra.mxu0 %v235
  %329 = vmatprep.subr.bf16.mxu0 0
  %330 = vmatpush1.bf16.msra.mxu0 %v236
  %331 = vmatprep.subr.bf16.mxu0 0
  %332 = vmatpush1.bf16.msra.mxu0 %v237
  %333 = vmatprep.subr.bf16.mxu0 0
  %334 = vmatpush1.bf16.msra.mxu0 %v238
  %335 = vmatprep.subr.bf16.mxu0 0
  %336 = vmatpush1.bf16.msra.mxu0 %v239
  %337 = vmatprep.subr.bf16.mxu0 0
  %338 = vmatpush1.bf16.msra.mxu0 %v240
  %339 = vmatprep.subr.bf16.mxu0 0
  %340 = vmatpush1.bf16.msra.mxu0 %v241
  %341 = vmatprep.subr.bf16.mxu0 0
  %342 = vmatpush1.bf16.msra.mxu0 %v242
  %343 = vmatprep.subr.bf16.mxu0 0
  %344 = vmatpush1.bf16.msra.mxu0 %v243
  %345 = vmatprep.subr.bf16.mxu0 0
  %346 = vmatpush1.bf16.msra.mxu0 %v244
  %347 = vmatprep.subr.bf16.mxu0 0
  %348 = vmatpush1.bf16.msra.mxu0 %v245
  %349 = vmatprep.subr.bf16.mxu0 0
  %350 = vmatpush1.bf16.msra.mxu0 %v246
  %351 = vmatprep.mubr.bf16.mxu0 %v86
  %352 = vmatmul.mubr.bf16.gmra.mrb[0].mxu0 %v85
  %v353 = vpop.f32.mrb[0].mxu0
  %v354 = vadd.f32 %v314, %v353
  %v355 = vpop.f32.mrb[0].mxu0
  %v356 = vpop.f32.mrb[0].mxu0
  %v357 = vpop.f32.mrb[0].mxu0
  %358 = vdwg.mxu0
  %v359 = vmul.f32 %v354, %v354
  %360 = vadd.xlane.f32.xlu0 %v359
  %v361 = vpop.xlane.xlu0 %360
  %v362 = vmax.f32 %v361, 1e-24
  %v363 = vrsqrt.pop %v362
  %v364 = vmul.f32 %v354, %v363
  %v366 = vcombine.high %v364, %v364
  %v368 = vunpack.c.l.s4 1966171168
  %v369 = vunpack.c.0.s8 %v368
  %v370 = vlaneseq
  %v371 = vshrl.u32 %v370, 7
  %v372 = vsub.s32 %v369, %v371
  %v373 = vrot.slane %v364, %v372
  %v375 = vunpack.c.l.s4 1966171168
  %v376 = vunpack.c.0.s8 %v375
  %v377 = vlaneseq
  %v378 = vshrl.u32 %v377, 7
  %v379 = vsub.s32 %v376, %v378
  %v380 = vrot.slane %v366, %v379
  %v381 = vcombine.high %v373, %v373
  %v382 = vcombine.high %v380, %v380
  %v384 = vunpack.c.l.s4 1966171168
  %v385 = vunpack.c.0.s8 %v384
  %v386 = vlaneseq
  %v387 = vshrl.u32 %v386, 7
  %v388 = vsub.s32 %v385, %v387
  %v389 = vrot.slane %v373, %v388
  %v391 = vunpack.c.l.s4 1966171168
  %v392 = vunpack.c.0.s8 %v391
  %v393 = vlaneseq
  %v394 = vshrl.u32 %v393, 7
  %v395 = vsub.s32 %v392, %v394
  %v396 = vrot.slane %v380, %v395
  %v398 = vunpack.c.l.s4 1966171168
  %v399 = vunpack.c.0.s8 %v398
  %v400 = vlaneseq
  %v401 = vshrl.u32 %v400, 7
  %v402 = vsub.s32 %v399, %v401
  %v403 = vrot.slane %v381, %v402
  %v405 = vunpack.c.l.s4 1966171168
  %v406 = vunpack.c.0.s8 %v405
  %v407 = vlaneseq
  %v408 = vshrl.u32 %v407, 7
  %v409 = vsub.s32 %v406, %v408
  %v410 = vrot.slane %v382, %v409
  %v411 = vcombine.high %v389, %v389
  %v412 = vcombine.high %v396, %v396
  %v413 = vcombine.high %v403, %v403
  %v414 = vcombine.high %v410, %v410
  %423 = vst [vmem:[%s3] sm:$0x1] %v389
  %424 = vst [vmem:[%s3 + $0x2] sm:$0x1] %v403
  %425 = vst [vmem:[%s3 + $0x4] sm:$0x1] %v411
  %426 = vst [vmem:[%s3 + $0x6] sm:$0x1] %v413
  %427 = vst [vmem:[%s3 + $0x8] sm:$0x1] %v396
  %428 = vst [vmem:[%s3 + $0xa] sm:$0x1] %v410
  %429 = vst [vmem:[%s3 + $0xc] sm:$0x1] %v412
  %430 = vst [vmem:[%s3 + $0xe] sm:$0x1] %v414
  %v431 = vld [vmem:[%s1] sm:$0xff]
  %v432 = vld [vmem:[%s1 + $0x8] sm:$0xff]
  %v433 = vld [vmem:[%s1 + $0x10] sm:$0xff]
  %v434 = vld [vmem:[%s1 + $0x18] sm:$0xff]
  %v435 = vpack.c.bf16 %v431, %v431
  %v436 = vpack.c.bf16 %v432, %v432
  %v437 = vpack.c.bf16 %v433, %v433
  %v438 = vpack.c.bf16 %v434, %v434
  %439 = vmatprep.subr.bf16.mxu0 0
  %440 = vmatpush1.bf16.msra.mxu0 %v215
  %441 = vmatprep.subr.bf16.mxu0 0
  %442 = vmatpush1.bf16.msra.mxu0 %v216
  %443 = vmatprep.subr.bf16.mxu0 0
  %444 = vmatpush1.bf16.msra.mxu0 %v217
  %445 = vmatprep.subr.bf16.mxu0 0
  %446 = vmatpush1.bf16.msra.mxu0 %v218
  %447 = vmatprep.subr.bf16.mxu0 0
  %448 = vmatpush1.bf16.msra.mxu0 %v219
  %449 = vmatprep.subr.bf16.mxu0 0
  %450 = vmatpush1.bf16.msra.mxu0 %v220
  %451 = vmatprep.subr.bf16.mxu0 0
  %452 = vmatpush1.bf16.msra.mxu0 %v221
  %453 = vmatprep.subr.bf16.mxu0 0
  %454 = vmatpush1.bf16.msra.mxu0 %v222
  %455 = vmatprep.subr.bf16.mxu0 0
  %456 = vmatpush1.bf16.msra.mxu0 %v223
  %457 = vmatprep.subr.bf16.mxu0 0
  %458 = vmatpush1.bf16.msra.mxu0 %v224
  %459 = vmatprep.subr.bf16.mxu0 0
  %460 = vmatpush1.bf16.msra.mxu0 %v225
  %461 = vmatprep.subr.bf16.mxu0 0
  %462 = vmatpush1.bf16.msra.mxu0 %v226
  %463 = vmatprep.subr.bf16.mxu0 0
  %464 = vmatpush1.bf16.msra.mxu0 %v227
  %465 = vmatprep.subr.bf16.mxu0 0
  %466 = vmatpush1.bf16.msra.mxu0 %v228
  %467 = vmatprep.subr.bf16.mxu0 0
  %468 = vmatpush1.bf16.msra.mxu0 %v229
  %469 = vmatprep.subr.bf16.mxu0 0
  %470 = vmatpush1.bf16.msra.mxu0 %v230
  %471 = vmatprep.mubr.bf16.mxu0 %v436
  %472 = vmatmul.mubr.bf16.gmra.mrb[0].mxu0 %v435
  %v473 = vpop.f32.mrb[0].mxu0
  %v474 = vadd.f32 0.0, %v473
  %v475 = vpop.f32.mrb[0].mxu0
  %v476 = vpop.f32.mrb[0].mxu0
  %v477 = vpop.f32.mrb[0].mxu0
  %478 = vdwg.mxu0
  %479 = vmatprep.subr.bf16.mxu0 0
  %480 = vmatpush1.bf16.msra.mxu0 %v231
  %481 = vmatprep.subr.bf16.mxu0 0
  %482 = vmatpush1.bf16.msra.mxu0 %v232
  %483 = vmatprep.subr.bf16.mxu0 0
  %484 = vmatpush1.bf16.msra.mxu0 %v233
  %485 = vmatprep.subr.bf16.mxu0 0
  %486 = vmatpush1.bf16.msra.mxu0 %v234
  %487 = vmatprep.subr.bf16.mxu0 0
  %488 = vmatpush1.bf16.msra.mxu0 %v235
  %489 = vmatprep.subr.bf16.mxu0 0
  %490 = vmatpush1.bf16.msra.mxu0 %v236
  %491 = vmatprep.subr.bf16.mxu0 0
  %492 = vmatpush1.bf16.msra.mxu0 %v237
  %493 = vmatprep.subr.bf16.mxu0 0
  %494 = vmatpush1.bf16.msra.mxu0 %v238
  %495 = vmatprep.subr.bf16.mxu0 0
  %496 = vmatpush1.bf16.msra.mxu0 %v239
  %497 = vmatprep.subr.bf16.mxu0 0
  %498 = vmatpush1.bf16.msra.mxu0 %v240
  %499 = vmatprep.subr.bf16.mxu0 0
  %500 = vmatpush1.bf16.msra.mxu0 %v241
  %501 = vmatprep.subr.bf16.mxu0 0
  %502 = vmatpush1.bf16.msra.mxu0 %v242
  %503 = vmatprep.subr.bf16.mxu0 0
  %504 = vmatpush1.bf16.msra.mxu0 %v243
  %505 = vmatprep.subr.bf16.mxu0 0
  %506 = vmatpush1.bf16.msra.mxu0 %v244
  %507 = vmatprep.subr.bf16.mxu0 0
  %508 = vmatpush1.bf16.msra.mxu0 %v245
  %509 = vmatprep.subr.bf16.mxu0 0
  %510 = vmatpush1.bf16.msra.mxu0 %v246
  %511 = vmatprep.mubr.bf16.mxu0 %v438
  %512 = vmatmul.mubr.bf16.gmra.mrb[0].mxu0 %v437
  %v513 = vpop.f32.mrb[0].mxu0
  %v514 = vadd.f32 %v474, %v513
  %v515 = vpop.f32.mrb[0].mxu0
  %v516 = vpop.f32.mrb[0].mxu0
  %v517 = vpop.f32.mrb[0].mxu0
  %518 = vdwg.mxu0
  %v519 = vmul.f32 %v514, %v514
  %520 = vadd.xlane.f32.xlu0 %v519
  %v521 = vpop.xlane.xlu0 %520
  %v522 = vmax.f32 %v521, 1e-24
  %v523 = vrsqrt.pop %v522
  %v524 = vmul.f32 %v514, %v523
  %v526 = vcombine.high %v524, %v524
  %v528 = vunpack.c.l.s4 1966171168
  %v529 = vunpack.c.0.s8 %v528
  %v530 = vlaneseq
  %v531 = vshrl.u32 %v530, 7
  %v532 = vsub.s32 %v529, %v531
  %v533 = vrot.slane %v524, %v532
  %v535 = vunpack.c.l.s4 1966171168
  %v536 = vunpack.c.0.s8 %v535
  %v537 = vlaneseq
  %v538 = vshrl.u32 %v537, 7
  %v539 = vsub.s32 %v536, %v538
  %v540 = vrot.slane %v526, %v539
  %v541 = vcombine.high %v533, %v533
  %v542 = vcombine.high %v540, %v540
  %v544 = vunpack.c.l.s4 1966171168
  %v545 = vunpack.c.0.s8 %v544
  %v546 = vlaneseq
  %v547 = vshrl.u32 %v546, 7
  %v548 = vsub.s32 %v545, %v547
  %v549 = vrot.slane %v533, %v548
  %v551 = vunpack.c.l.s4 1966171168
  %v552 = vunpack.c.0.s8 %v551
  %v553 = vlaneseq
  %v554 = vshrl.u32 %v553, 7
  %v555 = vsub.s32 %v552, %v554
  %v556 = vrot.slane %v540, %v555
  %v558 = vunpack.c.l.s4 1966171168
  %v559 = vunpack.c.0.s8 %v558
  %v560 = vlaneseq
  %v561 = vshrl.u32 %v560, 7
  %v562 = vsub.s32 %v559, %v561
  %v563 = vrot.slane %v541, %v562
  %v565 = vunpack.c.l.s4 1966171168
  %v566 = vunpack.c.0.s8 %v565
  %v567 = vlaneseq
  %v568 = vshrl.u32 %v567, 7
  %v569 = vsub.s32 %v566, %v568
  %v570 = vrot.slane %v542, %v569
  %v571 = vcombine.high %v549, %v549
  %v572 = vcombine.high %v556, %v556
  %v573 = vcombine.high %v563, %v563
  %v574 = vcombine.high %v570, %v570
  %583 = vst [vmem:[%s3 + $0x1] sm:$0x1] %v549
  %584 = vst [vmem:[%s3 + $0x3] sm:$0x1] %v563
  %585 = vst [vmem:[%s3 + $0x5] sm:$0x1] %v571
  %586 = vst [vmem:[%s3 + $0x7] sm:$0x1] %v573
  %587 = vst [vmem:[%s3 + $0x9] sm:$0x1] %v556
  %588 = vst [vmem:[%s3 + $0xb] sm:$0x1] %v570
  %589 = vst [vmem:[%s3 + $0xd] sm:$0x1] %v572
  %590 = vst [vmem:[%s3 + $0xf] sm:$0x1] %v574
  // Predicated region
  $region14: #{prototype_network_forward.1} parent=0 // pred_check
    _
  $region15: #{prototype_network_forward.1} parent=0 // pred_check_branch
    %592 = sbr.rel (0) target = $region17
  $region16: #{prototype_network_forward.1} parent=0 // pred_region
    _
  $region17: #{prototype_network_forward.1} parent=0 // pred_fallthru
    _
  // Predicated region
  $region18: #{prototype_network_forward.1} parent=0 // pred_check
    _
  $region19: #{prototype_network_forward.1} parent=0 // pred_check_branch
    %594 = sbr.rel (0) target = $region21
  $region20: #{prototype_network_forward.1} parent=0 // pred_region
    _
  $region21: #{prototype_network_forward.1} parent=0 // pred_fallthru
    _

</llo_original>
